<compile_context>
chip_gen: v5e
topology: v5e:2x2
jax: 0.10.0
libtpu: 0.0.40
codegen_flags: <defaults>
</compile_context>

<pallas_src>
import functools

import jax
import jax.numpy as jnp
from jax import lax
from jax.experimental import pallas as pl
from jax.experimental.pallas import tpu as pltpu


def _im2col_matmul_lrelu_kernel(p_ref, w_ref, b_ref, o_ref, *, neg_slope):
    """One lane-tile of output pixels per grid step.

    p_ref: (KKCp, Lt)   im2col patches tile (VMEM), lanes = pixels
    w_ref: (Cout, KKCp) folded weight matrix (VMEM)
    b_ref: (Cout, 1)    bias column (VMEM)
    o_ref: (Cout, Lt)   output tile (VMEM), lanes = pixels
    """
    acc = jnp.dot(w_ref[...], p_ref[...], preferred_element_type=jnp.float32)
    acc = acc + b_ref[...]                              # broadcast over lanes
    acc = jnp.where(acc > 0, acc, neg_slope * acc)      # LeakyReLU(0.2)
    o_ref[...] = acc.astype(o_ref.dtype)


def _pick_lane_tile(n_pix_padded):
    """Choose a lane tile (multiple of 128); prefer >= 2 grid steps (v7x dual
    TC / double-buffering) and cap tile size so large problems keep the
    pipeline busy without blowing VMEM."""
    for t in (2048, 1024, 512, 256, 128):
        if n_pix_padded % t == 0 and n_pix_padded // t >= 2:
            return t
    return n_pix_padded


def conv_direc_forward(x_nchw, weight_oihw, bias, *, kernel, dilation):
    """Pallas equivalent of ConvDirec.forward(x) -> (y, None).

    x_nchw:      (N, Cin, H, W)      float32
    weight_oihw: (Cout, Cin, K, K)   float32 (PyTorch layout)
    bias:        (Cout,)             float32
    """
    N, Cin, H, W = x_nchw.shape
    Cout = weight_oihw.shape[0]
    K = kernel
    assert K % 2 == 1, "padding formula matches PyTorch 'same' only for odd K"
    pad = dilation * (K - 1) // 2

    # ---- glue (plain JAX): spatial pad + im2col into lane-dense slab ----
    xp = jnp.pad(x_nchw, ((0, 0), (0, 0), (pad, pad), (pad, pad)))
    taps = []
    for kh in range(K):
        for kw in range(K):
            taps.append(
                xp[:, :, kh * dilation:kh * dilation + H,
                         kw * dilation:kw * dilation + W])       # (N, Cin, H, W)
    # tap order t = (kh*K + kw)*Cin + cin ; pixel order p = (n, h, w)
    P = jnp.stack(taps, axis=0)                                  # (K*K, N, Cin, H, W)
    P = jnp.transpose(P, (0, 2, 1, 3, 4))                        # (K*K, Cin, N, H, W)
    KKC = K * K * Cin
    NP = N * H * W
    P = P.reshape(KKC, NP)

    # Sublane-align the contraction axis (multiple of 8) with zero rows.
    KKCp = ((KKC + 7) // 8) * 8
    # Lane-align the pixel axis (multiple of 128).
    NP_pad = ((NP + 127) // 128) * 128
    if (KKCp != KKC) or (NP_pad != NP):
        P = jnp.pad(P, ((0, KKCp - KKC), (0, NP_pad - NP)))

    # Weight folded to (Cout, K*K*Cin) with matching tap order; zero-pad cols.
    Wm = jnp.transpose(weight_oihw, (0, 2, 3, 1)).reshape(Cout, KKC)
    if KKCp != KKC:
        Wm = jnp.pad(Wm, ((0, 0), (0, KKCp - KKC)))
    b_col = bias.reshape(Cout, 1)

    lt = _pick_lane_tile(NP_pad)
    grid = (NP_pad // lt,)

    kern = functools.partial(_im2col_matmul_lrelu_kernel, neg_slope=0.2)

    cost = pl.CostEstimate(
        flops=2 * Cout * KKCp * NP_pad,
        transcendentals=0,
        bytes_accessed=4 * (KKCp * NP_pad + Cout * KKCp + Cout + Cout * NP_pad),
    )

    y_flat = pl.pallas_call(
        kern,
        out_shape=jax.ShapeDtypeStruct((Cout, NP_pad), x_nchw.dtype),
        grid_spec=pltpu.PrefetchScalarGridSpec(
            num_scalar_prefetch=0,
            grid=grid,
            in_specs=[
                pl.BlockSpec((KKCp, lt), lambda i: (0, i)),
                pl.BlockSpec((Cout, KKCp), lambda i: (0, 0)),
                pl.BlockSpec((Cout, 1), lambda i: (0, 0)),
            ],
            out_specs=pl.BlockSpec((Cout, lt), lambda i: (0, i)),
        ),
        compiler_params=pltpu.CompilerParams(
            dimension_semantics=("parallel",),
        ),
        cost_estimate=cost,
    )(P, Wm, b_col)

    y = y_flat[:, :NP].reshape(Cout, N, H, W)
    y = jnp.transpose(y, (1, 0, 2, 3))                           # back to NCHW
    return y, None


def _reference(x_nchw, weight_oihw, bias, *, kernel, dilation):
    pad = dilation * (kernel - 1) // 2
    y = lax.conv_general_dilated(
        x_nchw, weight_oihw,
        window_strides=(1, 1),
        padding=((pad, pad), (pad, pad)),
        rhs_dilation=(dilation, dilation),
        dimension_numbers=("NCHW", "OIHW", "NCHW"),
    )
    y = y + bias.reshape(1, -1, 1, 1)
    return jnp.where(y > 0, y, 0.2 * y)


if __name__ == "__main__":
    # Module config: ConvDirec(inp_dim=4, oup_dim=8, kernel=3, dilation=2)
    inp_dim, oup_dim, kernel, dilation = 4, 8, 3, 2
    N, H, W = 2, 16, 16

    key = jax.random.PRNGKey(0)
    k_x, k_w, k_b = jax.random.split(key, 3)

    x = jax.random.normal(k_x, (N, inp_dim, H, W), dtype=jnp.float32)
    weight = 0.1 * jax.random.normal(k_w, (oup_dim, inp_dim, kernel, kernel),
                                     dtype=jnp.float32)
    bias = 0.1 * jax.random.normal(k_b, (oup_dim,), dtype=jnp.float32)

    y, h = conv_direc_forward(x, weight, bias, kernel=kernel, dilation=dilation)
    y = jax.block_until_ready(y)
    assert h is None

    y_ref = _reference(x, weight, bias, kernel=kernel, dilation=dilation)
    assert y.shape == (N, oup_dim, H, W)
    assert jnp.allclose(y, y_ref, atol=1e-4, rtol=1e-4), "mismatch vs reference conv"

    print("KERNEL_OK")
</pallas_src>

<mosaic_0001>
module attributes {stable_mosaic.version = 11 : i64} {
  func.func @_im2col_matmul_lrelu_kernel(%arg0: i32, %arg1: memref<40x256xf32, #tpu.memory_space<vmem>>, %arg2: memref<8x40xf32, #tpu.memory_space<vmem>>, %arg3: memref<8x1xf32, #tpu.memory_space<vmem>>, %arg4: memref<8x256xf32, #tpu.memory_space<vmem>>) attributes {dimension_semantics = [#tpu.dimension_semantics<parallel>], iteration_bounds = array<i64: 2>, scalar_prefetch = 0 : i64, scratch_operands = 0 : i64, tpu.core_type = #tpu.core_type<tc>, window_params = [{transform_indices = @transform_0, window_bounds = array<i64: 40, 256>}, {pipeline_mode = #tpu.pipeline_mode<synchronous>, transform_indices = @transform_1, window_bounds = array<i64: 8, 40>}, {pipeline_mode = #tpu.pipeline_mode<synchronous>, transform_indices = @transform_2, window_bounds = array<i64: 8, 1>}, {transform_indices = @transform_3, window_bounds = array<i64: 8, 256>}]} {
    %c0 = arith.constant 0 : index
    %c0_0 = arith.constant 0 : index
    %0 = vector.load %arg2[%c0, %c0_0] : memref<8x40xf32, #tpu.memory_space<vmem>>, vector<8x40xf32>
    %c0_1 = arith.constant 0 : index
    %c0_2 = arith.constant 0 : index
    %1 = vector.load %arg1[%c0_1, %c0_2] : memref<40x256xf32, #tpu.memory_space<vmem>>, vector<40x256xf32>
    %cst = arith.constant dense<0.000000e+00> : vector<8x256xf32>
    %2 = tpu.matmul %0, %1, %cst {dimension_numbers = #tpu.dot_dimension_numbers<[1], [0], [0], [1], [0, 0, 1, 1], [], []>} : vector<8x40xf32>, vector<40x256xf32>, vector<8x256xf32> -> vector<8x256xf32>
    %c0_3 = arith.constant 0 : index
    %c0_4 = arith.constant 0 : index
    %3 = vector.load %arg3[%c0_3, %c0_4] : memref<8x1xf32, #tpu.memory_space<vmem>>, vector<8x1xf32>
    %4 = vector.broadcast %3 : vector<8x1xf32> to vector<8x256xf32>
    %5 = arith.addf %2, %4 : vector<8x256xf32>
    %cst_5 = arith.constant 0.000000e+00 : f32
    %6 = vector.broadcast %cst_5 : f32 to vector<8x256xf32>
    %7 = arith.cmpf ogt, %5, %6 : vector<8x256xf32>
    %cst_6 = arith.constant 2.000000e-01 : f32
    %8 = vector.broadcast %cst_6 : f32 to vector<8x256xf32>
    %9 = arith.mulf %8, %5 : vector<8x256xf32>
    %10 = arith.select %7, %5, %9 : vector<8x256xi1>, vector<8x256xf32>
    %c0_7 = arith.constant 0 : index
    %c0_8 = arith.constant 0 : index
    %11 = vector.load %arg4[%c0_7, %c0_8] : memref<8x256xf32, #tpu.memory_space<vmem>>, vector<8x256xf32>
    tpu.vector_store %arg4[%c0_7, %c0_8], %10 {strides = array<i32>} : memref<8x256xf32, #tpu.memory_space<vmem>>, vector<8x256xf32>,
    return
  }
  func.func @transform_0(%arg0: i32) -> (i32, i32) {
    %c0_i32 = arith.constant 0 : i32
    %c0_i32_0 = arith.constant 0 : i32
    return %c0_i32, %arg0 : i32, i32
  }
  func.func @transform_1(%arg0: i32) -> (i32, i32) {
    %c0_i32 = arith.constant 0 : i32
    %c0_i32_0 = arith.constant 0 : i32
    %c0_i32_1 = arith.constant 0 : i32
    return %c0_i32, %c0_i32_0 : i32, i32
  }
  func.func @transform_2(%arg0: i32) -> (i32, i32) {
    %c0_i32 = arith.constant 0 : i32
    %c0_i32_0 = arith.constant 0 : i32
    %c0_i32_1 = arith.constant 0 : i32
    return %c0_i32, %c0_i32_0 : i32, i32
  }
  func.func @transform_3(%arg0: i32) -> (i32, i32) {
    %c0_i32 = arith.constant 0 : i32
    %c0_i32_0 = arith.constant 0 : i32
    return %c0_i32, %arg0 : i32, i32
  }
}

</mosaic_0001>

<llo_original>
// kernel: tpu_custom_call.1
$region0: #{tpu_custom_call.1}
  #allocation0 [shape = 'u32[]', space=smem, size = 0x4, offset = 0x4, fixed_abs, tag = 'smem constant byte address 0x4 - core index']
  #allocation1 [shape = 'u32[72,128]{1,0:T(1,128)}', space=vmem, size = 0x9000, scoped, tag = 'internal scratch']
  %s0 = inlined_call_operand.hbm [shape: f32[40,512], index: 0, kind: input, shape index: {}]
  %s1 = inlined_call_operand.vmem [shape: f32[8,40], index: 1, kind: input, shape index: {}]
  %s2 = inlined_call_operand.vmem [shape: f32[8,1], index: 2, kind: input, shape index: {}]
  %s3 = inlined_call_operand.hbm [shape: f32[8,512], index: 3, kind: output, shape index: {}]
  %s4 = sld [smem:[#allocation0]]
  $region49: #{tpu_custom_call.1} parent=0
    _
  %s6 = ssub.s32 1, %s4
  %s7 = scalar_select 0, %s6, %s4
  $region1: #{tpu_custom_call.1} parent=0
    #allocation2 [shape = 'u8[81920]{0}', space=vmem, size = 0x14000, scoped, tag = 'input window, operand 0']
    #allocation3 [shape = 's32[2]{0}', space=sflag, size = 0x8, scoped, tag = 'scoped memory for tpu_custom_call.1']
    #allocation4 [shape = 's32[2]{0}', space=sflag, size = 0x8, scoped, tag = 'scoped memory for tpu_custom_call.1']
    #allocation5 [shape = 'u8[16384]{0}', space=vmem, size = 0x4000, scoped, tag = 'output window, operand 0']
    %8 = vsyncpa [#allocation3], 0
    %s9 = scalar_lea.sflag [#allocation3], 1
    %10 = vsyncpa %s9, 0
    %11 = vsyncpa [#allocation4], 0
    %s12 = scalar_lea.sflag [#allocation4], 1
    %13 = vsyncpa %s12, 0
    loop: start=0, step=1, limit=4
    $region2: #{tpu_custom_call.1} parent=1 // loop_pre_header
      _
    $region3: #{tpu_custom_call.1} parent=1 // loop_header
      %s15 = sphi 0, %s19
      %p16 = scmp.ge.s32.totalorder %s15, 4
      %s25 = sphi 0, %s27
      %s28 = sphi 0, %s25
      %s29 = sphi 0, %s28
      %s45 = sphi 0, %s29
      %s49 = sphi 0, %s49
      %s51 = sphi 0, %s49
      %s52 = sphi 0, %s51
      %s66 = sphi 0, %s52
      %s70 = sphi 0, %s70
      %s72 = sphi 0, %s70
      %s73 = sphi 0, %s72
      %s87 = sphi 0, %s73
      %s93 = sphi 0, %s95
      %s96 = sphi 0, %s93
      %s97 = sphi 0, %s96
      %s113 = sphi 0, %s97
    $region4: #{tpu_custom_call.1} parent=1 // loop_header_branch
      %18 = sbr.rel (%p16) target = $region8
    $region5: #{tpu_custom_call.1} parent=1 // loop_body
      %s20 = ssub.s32 %s15, 1
      %s21 = ssub.s32 %s15, 2
      %s22 = sadd.s32 %s15, 1
      %s23 = ssub.s32 %s15, %s22
      %p24 = scmp.eq.s32.totalorder %s23, 0
      %s26 = sadd.s32 %s25, 1
      %s27 = scalar_select %p24, %s25, %s26
      %p30 = pneg %p24
      %p31 = scmp.eq.s32.totalorder %s15, 1
      %p32 = por %p30, %p31
      %p33 = scmp.ne.s32.totalorder %s25, %s28
      %p34 = scmp.eq.s32.totalorder %s15, 0
      %p35 = por %p33, %p34
      %p36 = scmp.ne.s32.totalorder %s25, %s28
      %p37 = scmp.eq.s32.totalorder %s20, 1
      %p38 = por %p36, %p37
      %p39 = scmp.ne.s32.totalorder %s28, %s29
      %p40 = scmp.eq.s32.totalorder %s20, 0
      %p41 = por %p39, %p40
      %p42 = scmp.ne.s32.totalorder %s28, %s29
      %p43 = scmp.eq.s32.totalorder %s21, 1
      %p44 = por %p42, %p43
      %p46 = scmp.ne.s32.totalorder %s29, %s45
      %p47 = scmp.eq.s32.totalorder %s21, 0
      %p48 = por %p46, %p47
      %s50 = sadd.s32 %s49, 1
      %p53 = scmp.eq.s32.totalorder %s15, 1
      %p54 = scmp.ne.s32.totalorder %s49, %s51
      %p55 = scmp.eq.s32.totalorder %s15, 0
      %p56 = por %p54, %p55
      %p57 = scmp.ne.s32.totalorder %s49, %s51
      %p58 = scmp.eq.s32.totalorder %s20, 1
      %p59 = por %p57, %p58
      %p60 = scmp.ne.s32.totalorder %s51, %s52
      %p61 = scmp.eq.s32.totalorder %s20, 0
      %p62 = por %p60, %p61
      %p63 = scmp.ne.s32.totalorder %s51, %s52
      %p64 = scmp.eq.s32.totalorder %s21, 1
      %p65 = por %p63, %p64
      %p67 = scmp.ne.s32.totalorder %s52, %s66
      %p68 = scmp.eq.s32.totalorder %s21, 0
      %p69 = por %p67, %p68
      %s71 = sadd.s32 %s70, 1
      %p74 = scmp.eq.s32.totalorder %s15, 1
      %p75 = scmp.ne.s32.totalorder %s70, %s72
      %p76 = scmp.eq.s32.totalorder %s15, 0
      %p77 = por %p75, %p76
      %p78 = scmp.ne.s32.totalorder %s70, %s72
      %p79 = scmp.eq.s32.totalorder %s20, 1
      %p80 = por %p78, %p79
      %p81 = scmp.ne.s32.totalorder %s72, %s73
      %p82 = scmp.eq.s32.totalorder %s20, 0
      %p83 = por %p81, %p82
      %p84 = scmp.ne.s32.totalorder %s72, %s73
      %p85 = scmp.eq.s32.totalorder %s21, 1
      %p86 = por %p84, %p85
      %p88 = scmp.ne.s32.totalorder %s73, %s87
      %p89 = scmp.eq.s32.totalorder %s21, 0
      %p90 = por %p88, %p89
      %s91 = ssub.s32 %s15, %s22
      %p92 = scmp.eq.s32.totalorder %s91, 0
      %s94 = sadd.s32 %s93, 1
      %s95 = scalar_select %p92, %s93, %s94
      %p98 = pneg %p92
      %p99 = scmp.eq.s32.totalorder %s15, 1
      %p100 = por %p98, %p99
      %p101 = scmp.ne.s32.totalorder %s93, %s96
      %p102 = scmp.eq.s32.totalorder %s15, 0
      %p103 = por %p101, %p102
      %p104 = scmp.ne.s32.totalorder %s93, %s96
      %p105 = scmp.eq.s32.totalorder %s20, 1
      %p106 = por %p104, %p105
      %p107 = scmp.ne.s32.totalorder %s96, %s97
      %p108 = scmp.eq.s32.totalorder %s20, 0
      %p109 = por %p107, %p108
      %p110 = scmp.ne.s32.totalorder %s96, %s97
      %p111 = scmp.eq.s32.totalorder %s21, 1
      %p112 = por %p110, %p111
      %p114 = scmp.ne.s32.totalorder %s97, %s113
      %p115 = scmp.eq.s32.totalorder %s21, 0
      %p116 = por %p114, %p115
      %p117 = scmp.le.s32.totalorder 1, %s15
      %p118 = scmp.lt.s32.totalorder %s15, 3
      %p119 = pnand %p117, %p118
      %p120 = pneg %p119
      // Predicated region
      $region9: #{tpu_custom_call.1} parent=5 // pred_check
        _
      $region10: #{tpu_custom_call.1} parent=5 // pred_check_branch
        %122 = sbr.rel (%p119) target = $region12
      $region11: #{tpu_custom_call.1} parent=5 // pred_region
        %s123 = ssub.s32 %s15, 1
        // Predicated region
        $region13: #{tpu_custom_call.1} parent=11 // pred_check
          %p124 = pneg %p62
        $region14: #{tpu_custom_call.1} parent=11 // pred_check_branch
          %126 = sbr.rel (%p124) target = $region16
        $region15: #{tpu_custom_call.1} parent=11 // pred_region
          _
        $region16: #{tpu_custom_call.1} parent=11 // pred_fallthru
          _
        // Predicated region
        $region17: #{tpu_custom_call.1} parent=11 // pred_check
          %p127 = pneg %p83
        $region18: #{tpu_custom_call.1} parent=11 // pred_check_branch
          %129 = sbr.rel (%p127) target = $region20
        $region19: #{tpu_custom_call.1} parent=11 // pred_region
          _
        $region20: #{tpu_custom_call.1} parent=11 // pred_fallthru
          _
      $region12: #{tpu_custom_call.1} parent=5 // pred_fallthru
        _
      %p130 = scmp.lt.s32.totalorder %s15, 2
      // Predicated region
      $region21: #{tpu_custom_call.1} parent=5 // pred_check
        %p131 = pneg %p130
      $region22: #{tpu_custom_call.1} parent=5 // pred_check_branch
        %133 = sbr.rel (%p131) target = $region24
      $region23: #{tpu_custom_call.1} parent=5 // pred_region
        // Predicated region
        $region25: #{tpu_custom_call.1} parent=23 // pred_check
          %p134 = pneg %p35
        $region26: #{tpu_custom_call.1} parent=23 // pred_check_branch
          %136 = sbr.rel (%p134) target = $region28
        $region27: #{tpu_custom_call.1} parent=23 // pred_region
          %s137 = sand.u32 %s25, 1
          %s138 = scalar_lea.sflag [#allocation3], %s137
          %s139 = sand.u32 %s25, 1
          %s140 = smul.addr %s139, 80
          %s141 = scalar_lea.vmem [#allocation2], %s140
          %s142 = smul.u32 2, %s15
          %144 = vsyncadd %s138, 0
          %s145 = smul.addr %s142, 8
          %s146 = scalar_lea.hbm %s0, %s145
          %s147 = sshll.u32 %s146, 4
          %s148 = int_to_ptr.hbm [resolvable:$true] %s147
          %s149 = sshll.u32 %s141, 4
          %s150 = int_to_ptr.vmem [resolvable:$true] %s149
          %155 = dma.hbm_to_vmem [thread:$0]  %s148, 1280, %s150, %s138, 512, 256, 16
        $region28: #{tpu_custom_call.1} parent=23 // pred_fallthru
          _
      $region24: #{tpu_custom_call.1} parent=5 // pred_fallthru
        _
      %p156 = scmp.le.s32.totalorder 1, %s15
      %p157 = scmp.lt.s32.totalorder %s15, 3
      %p158 = pnand %p156, %p157
      %p159 = pneg %p158
      // Predicated region
      $region29: #{tpu_custom_call.1} parent=5 // pred_check
        _
      $region30: #{tpu_custom_call.1} parent=5 // pred_check_branch
        %161 = sbr.rel (%p158) target = $region32
      $region31: #{tpu_custom_call.1} parent=5 // pred_region
        %s162 = ssub.s32 %s15, 1
        %s163 = sand.u32 %s28, 1
        %s164 = scalar_lea.sflag [#allocation3], %s163
        %s165 = sand.u32 %s28, 1
        %s166 = smul.addr %s165, 80
        %s167 = scalar_lea.vmem [#allocation2], %s166
        // Predicated region
        $region33: #{tpu_custom_call.1} parent=31 // pred_check
          %p168 = pneg %p41
        $region34: #{tpu_custom_call.1} parent=31 // pred_check_branch
          %170 = sbr.rel (%p168) target = $region36
        $region35: #{tpu_custom_call.1} parent=31 // pred_region
          %172 = dma.done %s164, 1280
        $region36: #{tpu_custom_call.1} parent=31 // pred_fallthru
          _
        %s173 = sand.u32 %s28, 1
        %s174 = scalar_lea.sflag [#allocation3], %s173
        %s175 = sand.u32 %s28, 1
        %s176 = smul.addr %s175, 80
        %s177 = scalar_lea.vmem [#allocation2], %s176
        %p178 = pneg %p41
        %p179 = pneg %p38
        %p180 = pneg %p62
        %p181 = pneg %p59
        %p182 = pneg %p83
        %p183 = pneg %p80
        %p184 = pneg %p109
        %p185 = pneg %p106
        %s186 = sand.u32 %s96, 1
        %s187 = scalar_lea.sflag [#allocation4], %s186
        %s188 = sand.u32 %s96, 1
        %s189 = smul.addr %s188, 16
        %s190 = scalar_lea.vmem [#allocation5], %s189
        %s191 = smul.u32 2, %s20
        %s192 = smul.u32 2, %s20
        %v193 = vld [vmem:[%s1] sm:$0xff]
        %v194 = vld [vmem:[%s167] sm:$0xff]
        %v195 = vld [vmem:[%s167 + $0x8] sm:$0xff]
        %v196 = vld [vmem:[%s167 + $0x10] sm:$0xff]
        %v197 = vld [vmem:[%s167 + $0x18] sm:$0xff]
        %v198 = vld [vmem:[%s167 + $0x20] sm:$0xff]
        %v199 = vld [vmem:[%s167 + $0x28] sm:$0xff]
        %v200 = vld [vmem:[%s167 + $0x30] sm:$0xff]
        %v201 = vld [vmem:[%s167 + $0x38] sm:$0xff]
        %v202 = vld [vmem:[%s167 + $0x40] sm:$0xff]
        %v203 = vld [vmem:[%s167 + $0x48] sm:$0xff]
        %v204 = vld [vmem:[%s2] sm:$0xff]
        %206 = vset.pattern.permute.xlu0 0
        %207 = vperm.xlu0 %206, %v204
        %v208 = vpop.permute.xlu0 %207
        %vm210 = vcmask 326656
        %v212 = vsel %vm210, %v193, 0
        %214 = vmatpush.msra.mxu0 0.0
        %215 = vmatpush.msra.mxu0 0.0
        %216 = vmatpush.msra.mxu0 0.0
        %217 = vmatpush.msra.mxu0 0.0
        %218 = vmatpush.msra.mxu0 0.0
        %219 = vmatpush.msra.mxu0 0.0
        %220 = vmatpush.msra.mxu0 0.0
        %221 = vmatpush.msra.mxu0 0.0
        %222 = vmatpush.msra.mxu0 0.0
        %223 = vmatpush.msra.mxu0 0.0
        %224 = vmatpush.msra.mxu0 0.0
        %225 = vmatpush.msra.mxu0 %v202
        %226 = vmatpush.msra.mxu0 %v200
        %227 = vmatpush.msra.mxu0 %v198
        %228 = vmatpush.msra.mxu0 %v196
        %229 = vmatpush.msra.mxu0 %v194
        %230 = vmatmul.f32.gmra.mxu0 %v212
        %v231 = vpop.f32.mrf.mxu0
        %v232 = vadd.f32 %v208, %v231
        %233 = vdwg.mxu0
        %234 = vmatpush.msra.mxu0 0.0
        %235 = vmatpush.msra.mxu0 0.0
        %236 = vmatpush.msra.mxu0 0.0
        %237 = vmatpush.msra.mxu0 0.0
        %238 = vmatpush.msra.mxu0 0.0
        %239 = vmatpush.msra.mxu0 0.0
        %240 = vmatpush.msra.mxu0 0.0
        %241 = vmatpush.msra.mxu0 0.0
        %242 = vmatpush.msra.mxu0 0.0
        %243 = vmatpush.msra.mxu0 0.0
        %244 = vmatpush.msra.mxu0 0.0
        %245 = vmatpush.msra.mxu0 %v203
        %246 = vmatpush.msra.mxu0 %v201
        %247 = vmatpush.msra.mxu0 %v199
        %248 = vmatpush.msra.mxu0 %v197
        %249 = vmatpush.msra.mxu0 %v195
        %250 = vmatmul.f32.gmra.mxu0 %v212
        %v251 = vpop.f32.mrf.mxu0
        %v252 = vadd.f32 %v208, %v251
        %253 = vdwg.mxu0
        %vm254 = vcmp.gt.f32.partialorder %v232, 0.0
        %vm255 = vcmp.gt.f32.partialorder %v252, 0.0
        %v256 = vmul.f32 %v232, 0.2
        %v257 = vmul.f32 %v252, 0.2
        %v258 = vsel %vm254, %v232, %v256
        %v259 = vsel %vm255, %v252, %v257
        %260 = vst [vmem:[%s190] sm:$0xff] %v258
        %261 = vst [vmem:[%s190 + $0x8] sm:$0xff] %v259
        %s262 = sand.u32 %s96, 1
        %s263 = scalar_lea.sflag [#allocation4], %s262
        %s264 = sand.u32 %s96, 1
        %s265 = smul.addr %s264, 16
        %s266 = scalar_lea.vmem [#allocation5], %s265
        // Predicated region
        $region37: #{tpu_custom_call.1} parent=31 // pred_check
          %p267 = pneg %p106
        $region38: #{tpu_custom_call.1} parent=31 // pred_check_branch
          %269 = sbr.rel (%p267) target = $region40
        $region39: #{tpu_custom_call.1} parent=31 // pred_region
          %s270 = smul.u32 2, %s20
          %272 = vsyncadd %s263, 0
          %s273 = smul.addr %s270, 8
          %s274 = scalar_lea.hbm %s3, %s273
          %s276 = sshll.u32 %s266, 4
          %s277 = int_to_ptr.vmem [resolvable:$true] %s276
          %s278 = sshll.u32 %s274, 4
          %s279 = int_to_ptr.hbm [resolvable:$true] %s278
          %281 = dma.vmem_to_hbm [thread:$0]  %s277, 256, %s279, %s263
        $region40: #{tpu_custom_call.1} parent=31 // pred_fallthru
          _
      $region32: #{tpu_custom_call.1} parent=5 // pred_fallthru
        _
      %p282 = scmp.le.s32.totalorder 2, %s15
      // Predicated region
      $region41: #{tpu_custom_call.1} parent=5 // pred_check
        %p283 = pneg %p282
      $region42: #{tpu_custom_call.1} parent=5 // pred_check_branch
        %285 = sbr.rel (%p283) target = $region44
      $region43: #{tpu_custom_call.1} parent=5 // pred_region
        %s286 = ssub.s32 %s15, 2
        // Predicated region
        $region45: #{tpu_custom_call.1} parent=43 // pred_check
          %p287 = pneg %p112
        $region46: #{tpu_custom_call.1} parent=43 // pred_check_branch
          %289 = sbr.rel (%p287) target = $region48
        $region47: #{tpu_custom_call.1} parent=43 // pred_region
          %s290 = sand.u32 %s97, 1
          %s291 = scalar_lea.sflag [#allocation4], %s290
          %s292 = sand.u32 %s97, 1
          %s293 = smul.addr %s292, 16
          %s294 = scalar_lea.vmem [#allocation5], %s293
          %296 = dma.done %s291, 256
        $region48: #{tpu_custom_call.1} parent=43 // pred_fallthru
          _
      $region44: #{tpu_custom_call.1} parent=5 // pred_fallthru
        _
    $region6: #{tpu_custom_call.1} parent=1 // loop_footer
      %s19 = sadd.s32 1, %s15
    $region7: #{tpu_custom_call.1} parent=1 // loop_footer_branch
      %14 = sbr.rel target = $region3
    $region8: #{tpu_custom_call.1} parent=1 // loop_exit
      _
    %297 = vsyncpa [#allocation3], 1
    %s298 = scalar_lea.sflag [#allocation3], 1
    %299 = vsyncpa %s298, 1
    %300 = vsyncpa [#allocation4], 1
    %s301 = scalar_lea.sflag [#allocation4], 1
    %302 = vsyncpa %s301, 1

</llo_original>
